<compile_context>
chip_gen: v7x
topology: tpu7x:2x2x1
jax: 0.10.0
libtpu: 0.0.40
codegen_flags: <defaults>
</compile_context>

<pallas_src>
import math
import functools

import jax
import jax.numpy as jnp
from jax import lax
from jax.experimental import pallas as pl
from jax.experimental.pallas import tpu as pltpu


def _lora_linear_kernel(x_ref, w_ref, h_ref, bt_ref, o_ref, acc_ref, *, scale):
    k = pl.program_id(2)

    # Base path: x (tm, tk) contracted against W (tn, tk) on K -> (tm, tn).
    partial = lax.dot_general(
        x_ref[...], w_ref[...],
        dimension_numbers=(((1,), (1,)), ((), ())),
        preferred_element_type=jnp.float32)

    @pl.when(k == 0)
    def _():
        acc_ref[...] = partial            # direct write: no zero-fill + read

    @pl.when(k > 0)
    def _():
        acc_ref[...] += partial

    @pl.when(k == pl.num_programs(2) - 1)
    def _():
        # LoRA up-projection fused into the epilogue: h (tm, r) @ B^T (r, tn)
        # -> (tm, tn) in f32, scaled, added to the base accumulator, and stored
        # once per (i, j) tile with a lane-dense (tn >= 128) store.
        lora = lax.dot_general(
            h_ref[...], bt_ref[...],
            dimension_numbers=(((1,), (0,)), ((), ())),
            preferred_element_type=jnp.float32)
        o_ref[...] = (acc_ref[...] + scale * lora).astype(o_ref.dtype)


def _round_up(x, m):
    return ((x + m - 1) // m) * m


def lora_optimized_linear(x, w, a, b, *, lora_alpha, lora_r,
                          tm_cap=512, tn_cap=512, tk_cap=1024):
    """x: (..., K) bf16; w: (N, K); a: (r, K); b: (N, r). Returns (..., N)."""
    K = x.shape[-1]
    N = w.shape[0]
    r = a.shape[0]
    assert w.shape == (N, K) and a.shape == (r, K) and b.shape == (N, r)
    scale = float(lora_alpha) / float(lora_r)

    lead = x.shape[:-1]
    x2d = x.reshape(-1, K)
    M = x2d.shape[0]

    # LoRA down-projection hoisted out of the kernel: a tiny (M, r, K) matmul
    # with f32 accumulation, cast to bf16 to mirror the module's bf16
    # nn.Linear output. Doing this inside the K loop would cost as many MXU
    # pushes as the base matmul and be recomputed for every N tile.
    h = lax.dot_general(
        x2d, a, dimension_numbers=(((1,), (1,)), ((), ())),
        preferred_element_type=jnp.float32).astype(x.dtype)

    # One-time transpose of B to (r, N): lane-dense (r, tn) tiles, contiguous
    # HBM DMA, and a plain NN contraction over r in the epilogue.
    bt = b.T

    # Tile selection + zero-padding to tile multiples. K-padding with zeros is
    # exact for the contraction; padded M/N rows/cols are sliced off below.
    tm = min(tm_cap, _round_up(M, 8))
    tn = min(tn_cap, _round_up(N, 128))
    tk = min(tk_cap, _round_up(K, 128))
    Mp, Np, Kp = _round_up(M, tm), _round_up(N, tn), _round_up(K, tk)

    if (Mp, Kp) != (M, K):
        x2d = jnp.pad(x2d, ((0, Mp - M), (0, Kp - K)))
    if (Np, Kp) != (N, K):
        w = jnp.pad(w, ((0, Np - N), (0, Kp - K)))
    if Mp != M:
        h = jnp.pad(h, ((0, Mp - M), (0, 0)))
    if Np != N:
        bt = jnp.pad(bt, ((0, 0), (0, Np - N)))

    grid = (Mp // tm, Np // tn, Kp // tk)

    # Advisory cost for XLA scheduling around the custom call.
    flops = 2 * M * N * K + 2 * M * N * r
    bytes_accessed = 2 * (Mp * Kp + Np * Kp + Mp * r + r * Np + Mp * Np)
    cost = pl.CostEstimate(flops=flops, transcendentals=0,
                           bytes_accessed=bytes_accessed)

    out2d = pl.pallas_call(
        functools.partial(_lora_linear_kernel, scale=scale),
        out_shape=jax.ShapeDtypeStruct((Mp, Np), x.dtype),
        grid_spec=pltpu.PrefetchScalarGridSpec(
            num_scalar_prefetch=0,
            grid=grid,
            in_specs=[
                pl.BlockSpec((tm, tk), lambda i, j, k: (i, k)),  # x   (M, K)
                pl.BlockSpec((tn, tk), lambda i, j, k: (j, k)),  # W   (N, K)
                pl.BlockSpec((tm, r), lambda i, j, k: (i, 0)),   # h   (M, r)
                pl.BlockSpec((r, tn), lambda i, j, k: (0, j)),   # B^T (r, N)
            ],
            out_specs=pl.BlockSpec((tm, tn), lambda i, j, k: (i, j)),
            scratch_shapes=[
                pltpu.VMEM((tm, tn), jnp.float32),  # f32 accumulator
            ],
        ),
        compiler_params=pltpu.CompilerParams(
            dimension_semantics=("parallel", "parallel", "arbitrary")),
        cost_estimate=cost,
    )(x2d, w, h, bt)

    if (Mp, Np) != (M, N):
        out2d = out2d[:M, :N]
    return out2d.reshape(*lead, N)


if __name__ == "__main__":
    # Module hyper-params (small, consistent with the nn.Module __init__).
    input_dim, output_dim = 32, 64
    lora_r, lora_alpha = 8, 16
    batch, seq = 2, 8
    dtype = jnp.bfloat16

    key = jax.random.PRNGKey(0)
    k_x, k_w, k_a, k_b = jax.random.split(key, 4)

    # Base weight: xavier_uniform-style bound.
    xav_bound = math.sqrt(6.0 / (input_dim + output_dim))
    w = jax.random.uniform(k_w, (output_dim, input_dim),
                           minval=-xav_bound, maxval=xav_bound).astype(dtype)
    # lora_weight_1: kaiming_uniform(a=sqrt(5)) -> bound = 1/sqrt(fan_in).
    ka_bound = 1.0 / math.sqrt(input_dim)
    a = jax.random.uniform(k_a, (lora_r, input_dim),
                           minval=-ka_bound, maxval=ka_bound).astype(dtype)
    # The module zero-inits lora_weight_2; use a NONZERO B here so the LoRA
    # branch (and the scale factor) are actually validated numerically.
    b = (0.05 * jax.random.normal(k_b, (output_dim, lora_r))).astype(dtype)

    x = jax.random.normal(k_x, (batch, seq, input_dim)).astype(dtype)

    out = lora_optimized_linear(x, w, a, b,
                                lora_alpha=lora_alpha, lora_r=lora_r)
    out = jax.block_until_ready(out)

    # Reference mirroring the kernel math: f32 accumulation on all matmuls,
    # bf16 LoRA intermediate (nn.Linear output), scale applied to the
    # up-projection result before the final bf16 cast.
    scale = lora_alpha / lora_r
    xf, wf, af, bf = (t.astype(jnp.float32) for t in (x, w, a, b))
    base = xf @ wf.T
    h = (xf @ af.T).astype(dtype).astype(jnp.float32)
    ref = (base + scale * (h @ bf.T)).astype(dtype)

    assert out.shape == (batch, seq, output_dim)
    assert jnp.allclose(out.astype(jnp.float32), ref.astype(jnp.float32),
                        atol=2e-2, rtol=2e-2)
    print("KERNEL_OK")
</pallas_src>

<mosaic_0001>
module attributes {stable_mosaic.version = 11 : i64} {
  func.func @_lora_linear_kernel(%arg0: i32, %arg1: i32, %arg2: i32, %arg3: memref<16x128xbf16, #tpu.memory_space<vmem>>, %arg4: memref<128x128xbf16, #tpu.memory_space<vmem>>, %arg5: memref<16x8xbf16, #tpu.memory_space<vmem>>, %arg6: memref<8x128xbf16, #tpu.memory_space<vmem>>, %arg7: memref<16x128xbf16, #tpu.memory_space<vmem>>, %arg8: memref<16x128xf32, #tpu.memory_space<vmem>>) attributes {dimension_semantics = [#tpu.dimension_semantics<parallel>, #tpu.dimension_semantics<parallel>, #tpu.dimension_semantics<arbitrary>], iteration_bounds = array<i64: 1, 1, 1>, scalar_prefetch = 0 : i64, scratch_operands = 1 : i64, tpu.core_type = #tpu.core_type<tc>, window_params = [{transform_indices = @transform_0, window_bounds = array<i64: 16, 128>}, {transform_indices = @transform_1, window_bounds = array<i64: 128, 128>}, {transform_indices = @transform_2, window_bounds = array<i64: 16, 8>}, {transform_indices = @transform_3, window_bounds = array<i64: 8, 128>}, {transform_indices = @transform_4, window_bounds = array<i64: 16, 128>}]} {
    %c0 = arith.constant 0 : index
    %c0_0 = arith.constant 0 : index
    %0 = vector.load %arg3[%c0, %c0_0] : memref<16x128xbf16, #tpu.memory_space<vmem>>, vector<16x128xbf16>
    %c0_1 = arith.constant 0 : index
    %c0_2 = arith.constant 0 : index
    %1 = vector.load %arg4[%c0_1, %c0_2] : memref<128x128xbf16, #tpu.memory_space<vmem>>, vector<128x128xbf16>
    %cst = arith.constant dense<0.000000e+00> : vector<16x128xf32>
    %2 = tpu.matmul %0, %1, %cst {dimension_numbers = #tpu.dot_dimension_numbers<[1], [1], [0], [0], [0, 0, 1, 0], [], []>} : vector<16x128xbf16>, vector<128x128xbf16>, vector<16x128xf32> -> vector<16x128xf32>
    %c0_i32 = arith.constant 0 : i32
    %3 = arith.cmpi eq, %arg2, %c0_i32 : i32
    %4 = arith.extui %3 : i1 to i32
    %c0_i32_3 = arith.constant 0 : i32
    %5 = arith.cmpi ne, %4, %c0_i32_3 : i32
    scf.if %5 {
      %c0_8 = arith.constant 0 : index
      %c0_9 = arith.constant 0 : index
      %12 = vector.load %arg8[%c0_8, %c0_9] : memref<16x128xf32, #tpu.memory_space<vmem>>, vector<16x128xf32>
      tpu.vector_store %arg8[%c0_8, %c0_9], %2 {strides = array<i32>} : memref<16x128xf32, #tpu.memory_space<vmem>>, vector<16x128xf32>,
    } else {
    }
    %c0_i32_4 = arith.constant 0 : i32
    %6 = arith.cmpi sgt, %arg2, %c0_i32_4 : i32
    %7 = arith.extui %6 : i1 to i32
    %c0_i32_5 = arith.constant 0 : i32
    %8 = arith.cmpi ne, %7, %c0_i32_5 : i32
    scf.if %8 {
      %c0_8 = arith.constant 0 : index
      %c0_9 = arith.constant 0 : index
      %12 = vector.load %arg8[%c0_8, %c0_9] : memref<16x128xf32, #tpu.memory_space<vmem>>, vector<16x128xf32>
      %13 = arith.addf %12, %2 : vector<16x128xf32>
      %c0_10 = arith.constant 0 : index
      %c0_11 = arith.constant 0 : index
      %14 = vector.load %arg8[%c0_10, %c0_11] : memref<16x128xf32, #tpu.memory_space<vmem>>, vector<16x128xf32>
      tpu.vector_store %arg8[%c0_10, %c0_11], %13 {strides = array<i32>} : memref<16x128xf32, #tpu.memory_space<vmem>>, vector<16x128xf32>,
    } else {
    }
    %c0_i32_6 = arith.constant 0 : i32
    %9 = arith.cmpi eq, %arg2, %c0_i32_6 : i32
    %10 = arith.extui %9 : i1 to i32
    %c0_i32_7 = arith.constant 0 : i32
    %11 = arith.cmpi ne, %10, %c0_i32_7 : i32
    scf.if %11 {
      %c0_8 = arith.constant 0 : index
      %c0_9 = arith.constant 0 : index
      %12 = vector.load %arg5[%c0_8, %c0_9] : memref<16x8xbf16, #tpu.memory_space<vmem>>, vector<16x8xbf16>
      %c0_10 = arith.constant 0 : index
      %c0_11 = arith.constant 0 : index
      %13 = vector.load %arg6[%c0_10, %c0_11] : memref<8x128xbf16, #tpu.memory_space<vmem>>, vector<8x128xbf16>
      %cst_12 = arith.constant dense<0.000000e+00> : vector<16x128xf32>
      %14 = tpu.matmul %12, %13, %cst_12 {dimension_numbers = #tpu.dot_dimension_numbers<[1], [0], [0], [1], [0, 0, 1, 1], [], []>} : vector<16x8xbf16>, vector<8x128xbf16>, vector<16x128xf32> -> vector<16x128xf32>
      %c0_13 = arith.constant 0 : index
      %c0_14 = arith.constant 0 : index
      %15 = vector.load %arg8[%c0_13, %c0_14] : memref<16x128xf32, #tpu.memory_space<vmem>>, vector<16x128xf32>
      %cst_15 = arith.constant 2.000000e+00 : f32
      %16 = vector.broadcast %cst_15 : f32 to vector<16x128xf32>
      %17 = arith.mulf %16, %14 : vector<16x128xf32>
      %18 = arith.addf %15, %17 : vector<16x128xf32>
      %19 = arith.truncf %18 : vector<16x128xf32> to vector<16x128xbf16>
      %c0_16 = arith.constant 0 : index
      %c0_17 = arith.constant 0 : index
      %20 = vector.load %arg7[%c0_16, %c0_17] : memref<16x128xbf16, #tpu.memory_space<vmem>>, vector<16x128xbf16>
      tpu.vector_store %arg7[%c0_16, %c0_17], %19 {strides = array<i32>} : memref<16x128xbf16, #tpu.memory_space<vmem>>, vector<16x128xbf16>,
    } else {
    }
    return
  }
  func.func @transform_0(%arg0: i32, %arg1: i32, %arg2: i32) -> (i32, i32) {
    %c0_i32 = arith.constant 0 : i32
    return %arg0, %arg2 : i32, i32
  }
  func.func @transform_1(%arg0: i32, %arg1: i32, %arg2: i32) -> (i32, i32) {
    %c0_i32 = arith.constant 0 : i32
    return %arg1, %arg2 : i32, i32
  }
  func.func @transform_2(%arg0: i32, %arg1: i32, %arg2: i32) -> (i32, i32) {
    %c0_i32 = arith.constant 0 : i32
    %c0_i32_0 = arith.constant 0 : i32
    return %arg0, %c0_i32 : i32, i32
  }
  func.func @transform_3(%arg0: i32, %arg1: i32, %arg2: i32) -> (i32, i32) {
    %c0_i32 = arith.constant 0 : i32
    %c0_i32_0 = arith.constant 0 : i32
    return %c0_i32, %arg1 : i32, i32
  }
  func.func @transform_4(%arg0: i32, %arg1: i32, %arg2: i32) -> (i32, i32) {
    %c0_i32 = arith.constant 0 : i32
    return %arg0, %arg1 : i32, i32
  }
}

</mosaic_0001>

<llo_original>
// kernel: tpu_custom_call.1
$region0: #{tpu_custom_call.1}
  #allocation0 [shape = 'u32[]', space=smem, size = 0x4, offset = 0x4, fixed_abs, tag = 'smem constant byte address 0x4 - core index']
  #allocation1 [shape = 'u32[144,128]{1,0:T(1,128)}', space=vmem, size = 0x12000, scoped, tag = 'internal scratch']
  #allocation2 [shape = 'f32[16,128]{1,0:T(8,128)}', space=vmem, size = 0x2000, scoped, tag = 'scratch operand']
  %s0 = inlined_call_operand.vmem [shape: bf16[16,128], index: 0, kind: input, shape index: {}]
  %s1 = inlined_call_operand.hbm [shape: bf16[128,128], index: 1, kind: input, shape index: {}]
  %s2 = inlined_call_operand.vmem [shape: bf16[16,8], index: 2, kind: input, shape index: {}]
  %s3 = inlined_call_operand.vmem [shape: bf16[8,128], index: 3, kind: input, shape index: {}]
  %s4 = inlined_call_operand.hbm [shape: bf16[16,128], index: 4, kind: output, shape index: {}]
  %s5 = sld [smem:[#allocation0]]
  $region42: #{tpu_custom_call.1} parent=0
    _
  %s7 = ssub.s32 1, %s5
  %s8 = scalar_select 0, %s7, %s5
  $region1: #{tpu_custom_call.1} parent=0
    #allocation3 [shape = 'u8[32768]{0}', space=vmem, size = 0x8000, scoped, tag = 'input window, operand 1, single buffered']
    #allocation4 [shape = 's32[1]{0}', space=sflag, size = 0x4, scoped, tag = 'scoped memory for tpu_custom_call.1']
    #allocation5 [shape = 's32[1]{0}', space=sflag, size = 0x4, scoped, tag = 'scoped memory for tpu_custom_call.1']
    #allocation6 [shape = 'u8[4096]{0}', space=vmem, size = 0x1000, scoped, tag = 'output window, operand 0, single buffered']
    %9 = vsyncpa [#allocation4], 0
    %10 = vsyncpa [#allocation5], 0
    // Predicated region
    $region2: #{tpu_custom_call.1} parent=1 // pred_check
      _
    $region3: #{tpu_custom_call.1} parent=1 // pred_check_branch
      %12 = sbr.rel (0) target = $region5
    $region4: #{tpu_custom_call.1} parent=1 // pred_region
      _
    $region5: #{tpu_custom_call.1} parent=1 // pred_fallthru
      _
    // Predicated region
    $region6: #{tpu_custom_call.1} parent=1 // pred_check
      _
    $region7: #{tpu_custom_call.1} parent=1 // pred_check_branch
      %14 = sbr.rel (0) target = $region9
    $region8: #{tpu_custom_call.1} parent=1 // pred_region
      %s16 = ssub.s32 1024, 1024
      %17 = vsyncadd [#allocation4], %s16
      %s18 = sshll.u32 [#allocation3], 4
      %s19 = int_to_ptr.vmem [resolvable:$true] %s18
      %24 = dma.hbm_to_vmem [thread:$0]  %s1, 1024, %s19, [#allocation4], 64, 64, 4
    $region9: #{tpu_custom_call.1} parent=1 // pred_fallthru
      _
    // Predicated region
    $region10: #{tpu_custom_call.1} parent=1 // pred_check
      _
    $region11: #{tpu_custom_call.1} parent=1 // pred_check_branch
      %26 = sbr.rel (0) target = $region13
    $region12: #{tpu_custom_call.1} parent=1 // pred_region
      _
    $region13: #{tpu_custom_call.1} parent=1 // pred_fallthru
      _
    // Predicated region
    $region14: #{tpu_custom_call.1} parent=1 // pred_check
      _
    $region15: #{tpu_custom_call.1} parent=1 // pred_check_branch
      %28 = sbr.rel (0) target = $region17
    $region16: #{tpu_custom_call.1} parent=1 // pred_region
      _
    $region17: #{tpu_custom_call.1} parent=1 // pred_fallthru
      _
    // Predicated region
    $region18: #{tpu_custom_call.1} parent=1 // pred_check
      _
    $region19: #{tpu_custom_call.1} parent=1 // pred_check_branch
      %30 = sbr.rel (0) target = $region21
    $region20: #{tpu_custom_call.1} parent=1 // pred_region
      %31 = dma.done [#allocation4], 1024
    $region21: #{tpu_custom_call.1} parent=1 // pred_fallthru
      _
    %v33 = vld [vmem:[%s0] sm:$0xf]
    %v34 = vld [vmem:[%s0 + $0x4] sm:$0xf]
    %v35 = vld [vmem:[#allocation3] sm:$0xf]
    %v36 = vld [vmem:[#allocation3 + $0x4] sm:$0xf]
    %v37 = vld [vmem:[#allocation3 + $0x8] sm:$0xf]
    %v38 = vld [vmem:[#allocation3 + $0xc] sm:$0xf]
    %v39 = vld [vmem:[#allocation3 + $0x10] sm:$0xf]
    %v40 = vld [vmem:[#allocation3 + $0x14] sm:$0xf]
    %v41 = vld [vmem:[#allocation3 + $0x18] sm:$0xf]
    %v42 = vld [vmem:[#allocation3 + $0x1c] sm:$0xf]
    %v43 = vld [vmem:[#allocation3 + $0x20] sm:$0xf]
    %v44 = vld [vmem:[#allocation3 + $0x24] sm:$0xf]
    %v45 = vld [vmem:[#allocation3 + $0x28] sm:$0xf]
    %v46 = vld [vmem:[#allocation3 + $0x2c] sm:$0xf]
    %v47 = vld [vmem:[#allocation3 + $0x30] sm:$0xf]
    %v48 = vld [vmem:[#allocation3 + $0x34] sm:$0xf]
    %v49 = vld [vmem:[#allocation3 + $0x38] sm:$0xf]
    %v50 = vld [vmem:[#allocation3 + $0x3c] sm:$0xf]
    %v53 = vunpack.c.l.b16 %v33
    %v54 = vunpack.c.l.b16 %v34
    %v55 = vpack.c.b16 %v54, %v53
    %v73 = vunpack.c.l.b16 %v35
    %v74 = vunpack.c.l.b16 %v36
    %v75 = vunpack.c.l.b16 %v37
    %v76 = vunpack.c.l.b16 %v38
    %v77 = vunpack.c.l.b16 %v39
    %v78 = vunpack.c.l.b16 %v40
    %v79 = vunpack.c.l.b16 %v41
    %v80 = vunpack.c.l.b16 %v42
    %v81 = vunpack.c.l.b16 %v43
    %v82 = vunpack.c.l.b16 %v44
    %v83 = vunpack.c.l.b16 %v45
    %v84 = vunpack.c.l.b16 %v46
    %v85 = vunpack.c.l.b16 %v47
    %v86 = vunpack.c.l.b16 %v48
    %v87 = vunpack.c.l.b16 %v49
    %v88 = vunpack.c.l.b16 %v50
    %v89 = vpack.c.b16 %v74, %v73
    %v90 = vpack.c.b16 %v76, %v75
    %v91 = vpack.c.b16 %v78, %v77
    %v92 = vpack.c.b16 %v80, %v79
    %v93 = vpack.c.b16 %v82, %v81
    %v94 = vpack.c.b16 %v84, %v83
    %v95 = vpack.c.b16 %v86, %v85
    %v96 = vpack.c.b16 %v88, %v87
    %105 = vmatprep.subr.bf16.mxu0 0
    %106 = vmatpush1.bf16.xpose.msra.mxu0 %v89
    %107 = vmatprep.subr.bf16.mxu0 0
    %108 = vmatpush1.bf16.xpose.msra.mxu0 %v90
    %109 = vmatprep.subr.bf16.mxu0 0
    %110 = vmatpush1.bf16.xpose.msra.mxu0 %v91
    %111 = vmatprep.subr.bf16.mxu0 0
    %112 = vmatpush1.bf16.xpose.msra.mxu0 %v92
    %113 = vmatprep.subr.bf16.mxu0 0
    %114 = vmatpush1.bf16.xpose.msra.mxu0 %v93
    %115 = vmatprep.subr.bf16.mxu0 0
    %116 = vmatpush1.bf16.xpose.msra.mxu0 %v94
    %117 = vmatprep.subr.bf16.mxu0 0
    %118 = vmatpush1.bf16.xpose.msra.mxu0 %v95
    %119 = vmatprep.subr.bf16.mxu0 0
    %120 = vmatpush1.bf16.xpose.msra.mxu0 %v96
    %121 = vmatprep.subr.bf16.mxu0 0
    %122 = vmatpush1.bf16.xpose.msra.mxu0 0
    %123 = vmatprep.subr.bf16.mxu0 0
    %124 = vmatpush1.bf16.xpose.msra.mxu0 0
    %125 = vmatprep.subr.bf16.mxu0 0
    %126 = vmatpush1.bf16.xpose.msra.mxu0 0
    %127 = vmatprep.subr.bf16.mxu0 0
    %128 = vmatpush1.bf16.xpose.msra.mxu0 0
    %129 = vmatprep.subr.bf16.mxu0 0
    %130 = vmatpush1.bf16.xpose.msra.mxu0 0
    %131 = vmatprep.subr.bf16.mxu0 0
    %132 = vmatpush1.bf16.xpose.msra.mxu0 0
    %133 = vmatprep.subr.bf16.mxu0 0
    %134 = vmatpush1.bf16.xpose.msra.mxu0 0
    %135 = vmatprep.subr.bf16.mxu0 0
    %136 = vmatpush1.bf16.xpose.msra.mxu0 0
    %137 = vmatprep.mubr.bf16.mxu0 0
    %138 = vmatmul.mubr.bf16.gmra.mrb[0].mxu0 %v55
    %v139 = vpop.f32.mrb[0].mxu0
    %v140 = vadd.f32 0.0, %v139
    %v141 = vpop.f32.mrb[0].mxu0
    %v142 = vpop.f32.mrb[0].mxu0
    %v143 = vadd.f32 0.0, %v142
    %v144 = vpop.f32.mrb[0].mxu0
    %145 = vdwg.mxu0
    %p146 = scmp.eq.s32.totalorder 0, 0
    // Predicated region
    $region22: #{tpu_custom_call.1} parent=1 // pred_check
      %p147 = pneg %p146
    $region23: #{tpu_custom_call.1} parent=1 // pred_check_branch
      %149 = sbr.rel (%p147) target = $region25
    $region24: #{tpu_custom_call.1} parent=1 // pred_region
      %150 = vst [vmem:[#allocation2] sm:$0xff] %v140
      %151 = vst [vmem:[#allocation2 + $0x8] sm:$0xff] %v143
    $region25: #{tpu_custom_call.1} parent=1 // pred_fallthru
      _
    %p152 = scmp.gt.s32.totalorder 0, 0
    // Predicated region
    $region26: #{tpu_custom_call.1} parent=1 // pred_check
      %p153 = pneg %p152
    $region27: #{tpu_custom_call.1} parent=1 // pred_check_branch
      %155 = sbr.rel (%p153) target = $region29
    $region28: #{tpu_custom_call.1} parent=1 // pred_region
      %v156 = vld [vmem:[#allocation2] sm:$0xff]
      %v157 = vld [vmem:[#allocation2 + $0x8] sm:$0xff]
      %v158 = vadd.f32 %v156, %v140
      %v159 = vadd.f32 %v157, %v143
      %160 = vst [vmem:[#allocation2] sm:$0xff] %v158
      %161 = vst [vmem:[#allocation2 + $0x8] sm:$0xff] %v159
    $region29: #{tpu_custom_call.1} parent=1 // pred_fallthru
      _
    // Predicated region
    $region30: #{tpu_custom_call.1} parent=1 // pred_check
      %p162 = pneg %p146
    $region31: #{tpu_custom_call.1} parent=1 // pred_check_branch
      %164 = sbr.rel (%p162) target = $region33
    $region32: #{tpu_custom_call.1} parent=1 // pred_region
      %v165 = vld [vmem:[%s2] sm:$0xf]
      %v166 = vld [vmem:[%s2 + $0x4] sm:$0xf]
      %v167 = vld [vmem:[%s3] sm:$0xf]
      %v170 = vunpack.c.l.b16 %v165
      %v171 = vunpack.c.l.b16 %v166
      %v172 = vpack.c.b16 %v171, %v170
      %vm173 = vcmask 64512
      %v175 = vsel %vm173, %v172, 0
      %vm177 = vcmask 1043456
      %v179 = vsel %vm177, %v167, 0
      %181 = vmatprep.subr.bf16.mxu0 0
      %182 = vmatpush1.bf16.msra.mxu0 %v179
      %183 = vmatprep.subr.bf16.mxu0 0
      %184 = vmatpush1.bf16.msra.mxu0 0
      %185 = vmatprep.subr.bf16.mxu0 0
      %186 = vmatpush1.bf16.msra.mxu0 0
      %187 = vmatprep.subr.bf16.mxu0 0
      %188 = vmatpush1.bf16.msra.mxu0 0
      %189 = vmatprep.subr.bf16.mxu0 0
      %190 = vmatpush1.bf16.msra.mxu0 0
      %191 = vmatprep.subr.bf16.mxu0 0
      %192 = vmatpush1.bf16.msra.mxu0 0
      %193 = vmatprep.subr.bf16.mxu0 0
      %194 = vmatpush1.bf16.msra.mxu0 0
      %195 = vmatprep.subr.bf16.mxu0 0
      %196 = vmatpush1.bf16.msra.mxu0 0
      %197 = vmatprep.subr.bf16.mxu0 0
      %198 = vmatpush1.bf16.msra.mxu0 0
      %199 = vmatprep.subr.bf16.mxu0 0
      %200 = vmatpush1.bf16.msra.mxu0 0
      %201 = vmatprep.subr.bf16.mxu0 0
      %202 = vmatpush1.bf16.msra.mxu0 0
      %203 = vmatprep.subr.bf16.mxu0 0
      %204 = vmatpush1.bf16.msra.mxu0 0
      %205 = vmatprep.subr.bf16.mxu0 0
      %206 = vmatpush1.bf16.msra.mxu0 0
      %207 = vmatprep.subr.bf16.mxu0 0
      %208 = vmatpush1.bf16.msra.mxu0 0
      %209 = vmatprep.subr.bf16.mxu0 0
      %210 = vmatpush1.bf16.msra.mxu0 0
      %211 = vmatprep.subr.bf16.mxu0 0
      %212 = vmatpush1.bf16.msra.mxu0 0
      %213 = vmatprep.mubr.bf16.mxu0 0
      %214 = vmatmul.mubr.bf16.gmra.mrb[0].mxu0 %v175
      %v215 = vpop.f32.mrb[0].mxu0
      %v216 = vadd.f32 0.0, %v215
      %v217 = vpop.f32.mrb[0].mxu0
      %v218 = vpop.f32.mrb[0].mxu0
      %v219 = vadd.f32 0.0, %v218
      %v220 = vpop.f32.mrb[0].mxu0
      %221 = vdwg.mxu0
      %v222 = vld [vmem:[#allocation2] sm:$0xff]
      %v223 = vld [vmem:[#allocation2 + $0x8] sm:$0xff]
      %v224 = vmul.f32 %v216, 2.0
      %v225 = vmul.f32 %v219, 2.0
      %v226 = vadd.f32 %v222, %v224
      %v227 = vadd.f32 %v223, %v225
      %v228 = vpack.c.bf16 %v227, %v226
      %v230 = vunpack.c.l.b16 %v228
      %v231 = vunpack.c.h.b16 %v228
      %v232 = vpack.c.b16 %v230, %v230
      %v233 = vpack.c.b16 %v231, %v231
      %236 = vst [vmem:[#allocation6] sm:$0xf] %v232
      %237 = vst [vmem:[#allocation6 + $0x4] sm:$0xf] %v233
    $region33: #{tpu_custom_call.1} parent=1 // pred_fallthru
      _
    // Predicated region
    $region34: #{tpu_custom_call.1} parent=1 // pred_check
      _
    $region35: #{tpu_custom_call.1} parent=1 // pred_check_branch
      %239 = sbr.rel (0) target = $region37
    $region36: #{tpu_custom_call.1} parent=1 // pred_region
      %s241 = ssub.s32 128, 128
      %242 = vsyncadd [#allocation5], %s241
      %s243 = sshll.u32 [#allocation6], 4
      %s244 = int_to_ptr.vmem [resolvable:$true] %s243
      %249 = dma.vmem_to_hbm [thread:$0]  %s244, 128, %s4, [#allocation5], 64, 64, 4
    $region37: #{tpu_custom_call.1} parent=1 // pred_fallthru
      _
    // Predicated region
    $region38: #{tpu_custom_call.1} parent=1 // pred_check
      _
    $region39: #{tpu_custom_call.1} parent=1 // pred_check_branch
      %251 = sbr.rel (0) target = $region41
    $region40: #{tpu_custom_call.1} parent=1 // pred_region
      %252 = dma.done [#allocation5], 128
    $region41: #{tpu_custom_call.1} parent=1 // pred_fallthru
      _
    %253 = vsyncpa [#allocation4], 1
    %254 = vsyncpa [#allocation5], 1

</llo_original>
